<compile_context>
chip_gen: v7x
topology: tpu7x:2x2x1
jax: 0.10.0
libtpu: 0.0.40
codegen_flags: <defaults>
</compile_context>

<pallas_src>
import functools

import jax
import jax.numpy as jnp
from jax.experimental import pallas as pl
from jax.experimental.pallas import tpu as pltpu


def _round_up(n, m):
    return ((n + m - 1) // m) * m


# ----------------------------------------------------------------------------- kernel
def _mlp_kernel(*refs, num_hidden):
    """Plain MLP chain: x -> [relu(h @ W + shift)] * num_hidden -> h @ W_out + b_out.

    Ref layout:
      [x_block,
       (W_hidden, shift_hidden) * num_hidden,   # encoder layers (block-diag) + shared layers
       W_out_padded, b_out_padded,
       o_block]
    Weights may be bf16 (activations are cast at the dot inputs); accumulation is f32 and the
    bias-add + ReLU happen on the f32 accumulator.
    """
    x_ref = refs[0]
    o_ref = refs[-1]

    h = x_ref[...].astype(jnp.float32)
    idx = 1
    for _ in range(num_hidden):
        w_ref, s_ref = refs[idx], refs[idx + 1]
        idx += 2
        h = jnp.maximum(
            jnp.dot(h.astype(w_ref.dtype), w_ref[...],
                    preferred_element_type=jnp.float32) + s_ref[...],
            0.0,
        )

    w_ref, b_ref = refs[idx], refs[idx + 1]
    o_ref[...] = (
        jnp.dot(h.astype(w_ref.dtype), w_ref[...],
                preferred_element_type=jnp.float32) + b_ref[...]
    ).astype(o_ref.dtype)


# ------------------------------------------------------------------------- parameters
def _linear_init(key, fan_in, fan_out):
    """PyTorch nn.Linear default init: U(-1/sqrt(fan_in), 1/sqrt(fan_in))."""
    kw, kb = jax.random.split(key)
    bound = 1.0 / jnp.sqrt(jnp.float32(fan_in))
    w = jax.random.uniform(kw, (fan_in, fan_out), jnp.float32, -bound, bound)
    b = jax.random.uniform(kb, (fan_out,), jnp.float32, -bound, bound)
    return w, b


def _bn_fold(dim, eps=1e-5):
    """Fold PyTorch-default BatchNorm1d (eval mode) into per-feature scale/shift."""
    gamma = jnp.ones((dim,), jnp.float32)
    beta = jnp.zeros((dim,), jnp.float32)
    running_mean = jnp.zeros((dim,), jnp.float32)
    running_var = jnp.ones((dim,), jnp.float32)
    scale = gamma / jnp.sqrt(running_var + eps)
    shift = beta - running_mean * scale
    return scale, shift


def init_params(key, input_dims, modality_hidden_dims, shared_hidden_dims, num_classes):
    """Raw parameters: per layer (W, b, bn_scale, bn_shift); final layer (W, b)."""
    params = {"modalities": {}, "shared": []}
    keys = jax.random.split(key, len(input_dims) + len(shared_hidden_dims) + 1)
    ki = 0
    for modality, in_dim in input_dims.items():
        layers = []
        dims = [in_dim] + list(modality_hidden_dims)
        for li in range(len(modality_hidden_dims)):
            w, b = _linear_init(keys[ki], dims[li], dims[li + 1])
            scale, shift = _bn_fold(dims[li + 1])
            layers.append((w, b, scale, shift))
        params["modalities"][modality] = layers
        ki += 1
    fusion_dim = len(input_dims) * modality_hidden_dims[-1]  # fusion_method == 'concat'
    dims = [fusion_dim] + list(shared_hidden_dims)
    for li in range(len(shared_hidden_dims)):
        w, b = _linear_init(keys[ki], dims[li], dims[li + 1])
        scale, shift = _bn_fold(dims[li + 1])
        params["shared"].append((w, b, scale, shift))
        ki += 1
    w, b = _linear_init(keys[ki], shared_hidden_dims[-1], num_classes)
    params["out"] = (w, b)
    return params


def fold_params(params, weight_dtype=jnp.float32):
    """One-time host prep.

    - Folds BN into (W', shift').
    - Builds a block-diagonal weight per encoder layer so all M modality matmuls + the concat
      collapse into one matmul per layer (the fused features fall out of the last encoder layer
      with no scratch buffer).
    - Lane-pads the final layer to a multiple of 128 (lane-dense output store).
    - Optionally stores weights in bf16 (activations cast at the dot; f32 accumulation).
    """
    modalities = list(params["modalities"].keys())
    layer_lists = [params["modalities"][m] for m in modalities]
    n_enc_layers = len(layer_lists[0])
    assert all(len(ls) == n_enc_layers for ls in layer_lists), \
        "all modality encoders must have the same depth"

    hidden = []
    # ---- encoder layers -> block-diagonal fused layers
    for li in range(n_enc_layers):
        ws, shifts = [], []
        for ls in layer_lists:
            w, b, scale, shift = ls[li]
            ws.append(w * scale[None, :])
            shifts.append(b * scale + shift)
        out_w = ws[0].shape[1]
        assert all(w.shape[1] == out_w for w in ws), \
            "all modality encoders must share modality_hidden_dims"
        in_total = sum(w.shape[0] for w in ws)
        out_total = sum(w.shape[1] for w in ws)
        w_bd = jnp.zeros((in_total, out_total), jnp.float32)
        ro, co = 0, 0
        for w in ws:
            w_bd = w_bd.at[ro:ro + w.shape[0], co:co + w.shape[1]].set(w)
            ro += w.shape[0]
            co += w.shape[1]
        s_cat = jnp.concatenate(shifts).reshape(1, -1).astype(jnp.float32)
        hidden.append((w_bd.astype(weight_dtype), s_cat))

    # ---- shared layers
    for (w, b, scale, shift) in params["shared"]:
        hidden.append(((w * scale[None, :]).astype(weight_dtype),
                       (b * scale + shift).reshape(1, -1).astype(jnp.float32)))

    # ---- final linear, lane-padded
    w, b = params["out"]
    n = w.shape[1]
    n_pad = _round_up(max(n, 128), 128)
    w_pad = jnp.zeros((w.shape[0], n_pad), jnp.float32).at[:, :n].set(w).astype(weight_dtype)
    b_pad = jnp.zeros((1, n_pad), jnp.float32).at[:, :n].set(b)

    return {
        "modalities": modalities,
        "in_dims": [layer_lists[i][0][0].shape[0] for i in range(len(modalities))],
        "hidden": hidden,
        "out": (w_pad, b_pad),
        "num_classes": n,
    }


# ---------------------------------------------------------------------------- forward
def forward(folded, x_dict, batch_tile=128):
    modalities = folded["modalities"]
    hidden = folded["hidden"]
    w_out, b_out = folded["out"]
    num_classes = folded["num_classes"]
    n_pad = w_out.shape[1]

    # Host-side concat of modality inputs; the block-diagonal first layer then produces the
    # concatenated (fused) encodings directly.
    x_cat = jnp.concatenate([x_dict[m].astype(jnp.float32) for m in modalities], axis=1)
    B, K0 = x_cat.shape

    # Batch tiling (parallel grid axis — lets v7x's 2 TensorCores split the batch).
    TB = min(_round_up(B, 8), _round_up(batch_tile, 8))
    B_pad = _round_up(B, TB)
    if B_pad != B:
        x_cat = jnp.zeros((B_pad, K0), jnp.float32).at[:B, :].set(x_cat)

    weight_args = []
    for (w, s) in hidden:
        weight_args += [w, s]
    weight_args += [w_out, b_out]

    # Advisory cost estimate for XLA scheduling around the custom call.
    flops = 0
    for (w, _) in hidden:
        flops += 2 * B_pad * w.shape[0] * w.shape[1]
    flops += 2 * B_pad * w_out.shape[0] * w_out.shape[1]
    bytes_accessed = (
        x_cat.size * x_cat.dtype.itemsize
        + sum(int(a.size) * a.dtype.itemsize for a in weight_args)
        + B_pad * n_pad * 4
    )
    cost = pl.CostEstimate(flops=flops, transcendentals=0, bytes_accessed=bytes_accessed)

    kernel = functools.partial(_mlp_kernel, num_hidden=len(hidden))

    # Weights are grid-invariant: keep them single-buffered, fully VMEM-resident.
    weight_spec = pl.BlockSpec(memory_space=pltpu.MemorySpace.VMEM)

    out_padded = pl.pallas_call(
        kernel,
        out_shape=jax.ShapeDtypeStruct((B_pad, n_pad), jnp.float32),
        grid=(B_pad // TB,),
        in_specs=[pl.BlockSpec((TB, K0), lambda i: (i, 0))]
                 + [weight_spec] * len(weight_args),
        out_specs=pl.BlockSpec((TB, n_pad), lambda i: (i, 0)),
        compiler_params=pltpu.CompilerParams(dimension_semantics=("parallel",)),
        cost_estimate=cost,
    )(x_cat, *weight_args)

    return out_padded[:B, :num_classes]


def forward_reference(params, x_dict):
    """Pure-JAX reference (unfolded BN, per-modality encoders, explicit concat)."""
    encoded = []
    for modality, layers in params["modalities"].items():
        h = x_dict[modality]
        for (w, b, scale, shift) in layers:
            h = jnp.maximum((h @ w + b) * scale + shift, 0.0)
        encoded.append(h)
    h = jnp.concatenate(encoded, axis=1)
    for (w, b, scale, shift) in params["shared"]:
        h = jnp.maximum((h @ w + b) * scale + shift, 0.0)
    w, b = params["out"]
    return h @ w + b


# ------------------------------------------------------------------------------- main
if __name__ == "__main__":
    batch = 8
    input_dims = {"eeg": 32, "audio": 48, "text": 64}
    modality_hidden_dims = [128]
    shared_hidden_dims = [128, 64]
    num_classes = 1

    key = jax.random.PRNGKey(0)
    kp, kx = jax.random.split(key)
    params = init_params(kp, input_dims, modality_hidden_dims, shared_hidden_dims, num_classes)

    xkeys = jax.random.split(kx, len(input_dims))
    x_dict = {
        m: jax.random.normal(xkeys[i], (batch, d), jnp.float32)
        for i, (m, d) in enumerate(input_dims.items())
    }

    ref = forward_reference(params, x_dict)

    # f32 weights (exact-semantics path)
    folded = fold_params(params, weight_dtype=jnp.float32)
    out = jax.block_until_ready(forward(folded, x_dict))
    assert out.shape == (batch, num_classes), out.shape
    assert jnp.allclose(out, ref, atol=1e-4, rtol=1e-4), (out, ref)

    # bf16 weights / f32 accumulation (v6e/v7x production path) — looser tolerance expected.
    folded_bf16 = fold_params(params, weight_dtype=jnp.bfloat16)
    out_bf16 = jax.block_until_ready(forward(folded_bf16, x_dict))
    assert out_bf16.shape == (batch, num_classes), out_bf16.shape
    assert bool(jnp.all(jnp.isfinite(out_bf16)))
    assert jnp.allclose(out_bf16, ref, atol=1e-1, rtol=1e-1), (out_bf16, ref)

    print("KERNEL_OK")
</pallas_src>

<mosaic_0001>
module attributes {stable_mosaic.version = 11 : i64} {
  func.func @_mlp_kernel(%arg0: i32, %arg1: memref<8x144xf32, #tpu.memory_space<vmem>>, %arg2: memref<144x384xf32, #tpu.memory_space<vmem>>, %arg3: memref<1x384xf32, #tpu.memory_space<vmem>>, %arg4: memref<384x128xf32, #tpu.memory_space<vmem>>, %arg5: memref<1x128xf32, #tpu.memory_space<vmem>>, %arg6: memref<128x64xf32, #tpu.memory_space<vmem>>, %arg7: memref<1x64xf32, #tpu.memory_space<vmem>>, %arg8: memref<64x128xf32, #tpu.memory_space<vmem>>, %arg9: memref<1x128xf32, #tpu.memory_space<vmem>>, %arg10: memref<8x128xf32, #tpu.memory_space<vmem>>) attributes {dimension_semantics = [#tpu.dimension_semantics<parallel>], iteration_bounds = array<i64: 1>, scalar_prefetch = 0 : i64, scratch_operands = 0 : i64, tpu.core_type = #tpu.core_type<tc>, window_params = [{transform_indices = @transform_0, window_bounds = array<i64: 8, 144>}, {pipeline_mode = #tpu.pipeline_mode<synchronous>, transform_indices = @transform_1, window_bounds = array<i64: 144, 384>}, {pipeline_mode = #tpu.pipeline_mode<synchronous>, transform_indices = @transform_2, window_bounds = array<i64: 1, 384>}, {pipeline_mode = #tpu.pipeline_mode<synchronous>, transform_indices = @transform_3, window_bounds = array<i64: 384, 128>}, {pipeline_mode = #tpu.pipeline_mode<synchronous>, transform_indices = @transform_4, window_bounds = array<i64: 1, 128>}, {pipeline_mode = #tpu.pipeline_mode<synchronous>, transform_indices = @transform_5, window_bounds = array<i64: 128, 64>}, {pipeline_mode = #tpu.pipeline_mode<synchronous>, transform_indices = @transform_6, window_bounds = array<i64: 1, 64>}, {pipeline_mode = #tpu.pipeline_mode<synchronous>, transform_indices = @transform_7, window_bounds = array<i64: 64, 128>}, {pipeline_mode = #tpu.pipeline_mode<synchronous>, transform_indices = @transform_8, window_bounds = array<i64: 1, 128>}, {transform_indices = @transform_9, window_bounds = array<i64: 8, 128>}]} {
    %c0 = arith.constant 0 : index
    %c0_0 = arith.constant 0 : index
    %0 = vector.load %arg1[%c0, %c0_0] : memref<8x144xf32, #tpu.memory_space<vmem>>, vector<8x144xf32>
    %c0_1 = arith.constant 0 : index
    %c0_2 = arith.constant 0 : index
    %1 = vector.load %arg2[%c0_1, %c0_2] : memref<144x384xf32, #tpu.memory_space<vmem>>, vector<144x384xf32>
    %cst = arith.constant dense<0.000000e+00> : vector<8x384xf32>
    %2 = tpu.matmul %0, %1, %cst {dimension_numbers = #tpu.dot_dimension_numbers<[1], [0], [0], [1], [0, 0, 1, 1], [], []>} : vector<8x144xf32>, vector<144x384xf32>, vector<8x384xf32> -> vector<8x384xf32>
    %c0_3 = arith.constant 0 : index
    %c0_4 = arith.constant 0 : index
    %3 = vector.load %arg3[%c0_3, %c0_4] : memref<1x384xf32, #tpu.memory_space<vmem>>, vector<1x384xf32>
    %4 = vector.broadcast %3 : vector<1x384xf32> to vector<8x384xf32>
    %5 = arith.addf %2, %4 : vector<8x384xf32>
    %cst_5 = arith.constant 0.000000e+00 : f32
    %6 = vector.broadcast %cst_5 : f32 to vector<8x384xf32>
    %7 = arith.maximumf %5, %6 : vector<8x384xf32>
    %c0_6 = arith.constant 0 : index
    %c0_7 = arith.constant 0 : index
    %8 = vector.load %arg4[%c0_6, %c0_7] : memref<384x128xf32, #tpu.memory_space<vmem>>, vector<384x128xf32>
    %cst_8 = arith.constant dense<0.000000e+00> : vector<8x128xf32>
    %9 = tpu.matmul %7, %8, %cst_8 {dimension_numbers = #tpu.dot_dimension_numbers<[1], [0], [0], [1], [0, 0, 1, 1], [], []>} : vector<8x384xf32>, vector<384x128xf32>, vector<8x128xf32> -> vector<8x128xf32>
    %c0_9 = arith.constant 0 : index
    %c0_10 = arith.constant 0 : index
    %10 = vector.load %arg5[%c0_9, %c0_10] : memref<1x128xf32, #tpu.memory_space<vmem>>, vector<1x128xf32>
    %11 = vector.broadcast %10 : vector<1x128xf32> to vector<8x128xf32>
    %12 = arith.addf %9, %11 : vector<8x128xf32>
    %cst_11 = arith.constant 0.000000e+00 : f32
    %13 = vector.broadcast %cst_11 : f32 to vector<8x128xf32>
    %14 = arith.maximumf %12, %13 : vector<8x128xf32>
    %c0_12 = arith.constant 0 : index
    %c0_13 = arith.constant 0 : index
    %15 = vector.load %arg6[%c0_12, %c0_13] : memref<128x64xf32, #tpu.memory_space<vmem>>, vector<128x64xf32>
    %cst_14 = arith.constant dense<0.000000e+00> : vector<8x64xf32>
    %16 = tpu.matmul %14, %15, %cst_14 {dimension_numbers = #tpu.dot_dimension_numbers<[1], [0], [0], [1], [0, 0, 1, 1], [], []>} : vector<8x128xf32>, vector<128x64xf32>, vector<8x64xf32> -> vector<8x64xf32>
    %c0_15 = arith.constant 0 : index
    %c0_16 = arith.constant 0 : index
    %17 = vector.load %arg7[%c0_15, %c0_16] : memref<1x64xf32, #tpu.memory_space<vmem>>, vector<1x64xf32>
    %18 = vector.broadcast %17 : vector<1x64xf32> to vector<8x64xf32>
    %19 = arith.addf %16, %18 : vector<8x64xf32>
    %cst_17 = arith.constant 0.000000e+00 : f32
    %20 = vector.broadcast %cst_17 : f32 to vector<8x64xf32>
    %21 = arith.maximumf %19, %20 : vector<8x64xf32>
    %c0_18 = arith.constant 0 : index
    %c0_19 = arith.constant 0 : index
    %22 = vector.load %arg8[%c0_18, %c0_19] : memref<64x128xf32, #tpu.memory_space<vmem>>, vector<64x128xf32>
    %cst_20 = arith.constant dense<0.000000e+00> : vector<8x128xf32>
    %23 = tpu.matmul %21, %22, %cst_20 {dimension_numbers = #tpu.dot_dimension_numbers<[1], [0], [0], [1], [0, 0, 1, 1], [], []>} : vector<8x64xf32>, vector<64x128xf32>, vector<8x128xf32> -> vector<8x128xf32>
    %c0_21 = arith.constant 0 : index
    %c0_22 = arith.constant 0 : index
    %24 = vector.load %arg9[%c0_21, %c0_22] : memref<1x128xf32, #tpu.memory_space<vmem>>, vector<1x128xf32>
    %25 = vector.broadcast %24 : vector<1x128xf32> to vector<8x128xf32>
    %26 = arith.addf %23, %25 : vector<8x128xf32>
    %c0_23 = arith.constant 0 : index
    %c0_24 = arith.constant 0 : index
    %27 = vector.load %arg10[%c0_23, %c0_24] : memref<8x128xf32, #tpu.memory_space<vmem>>, vector<8x128xf32>
    tpu.vector_store %arg10[%c0_23, %c0_24], %26 {strides = array<i32>} : memref<8x128xf32, #tpu.memory_space<vmem>>, vector<8x128xf32>,
    return
  }
  func.func @transform_0(%arg0: i32) -> (i32, i32) {
    %c0_i32 = arith.constant 0 : i32
    %c0_i32_0 = arith.constant 0 : i32
    return %arg0, %c0_i32 : i32, i32
  }
  func.func @transform_1(%arg0: i32) -> (i32, i32) {
    %c0_i32 = arith.constant 0 : i32
    %c0_i32_0 = arith.constant 0 : i32
    %c0_i32_1 = arith.constant 0 : i32
    return %c0_i32, %c0_i32_0 : i32, i32
  }
  func.func @transform_2(%arg0: i32) -> (i32, i32) {
    %c0_i32 = arith.constant 0 : i32
    %c0_i32_0 = arith.constant 0 : i32
    %c0_i32_1 = arith.constant 0 : i32
    return %c0_i32, %c0_i32_0 : i32, i32
  }
  func.func @transform_3(%arg0: i32) -> (i32, i32) {
    %c0_i32 = arith.constant 0 : i32
    %c0_i32_0 = arith.constant 0 : i32
    %c0_i32_1 = arith.constant 0 : i32
    return %c0_i32, %c0_i32_0 : i32, i32
  }
  func.func @transform_4(%arg0: i32) -> (i32, i32) {
    %c0_i32 = arith.constant 0 : i32
    %c0_i32_0 = arith.constant 0 : i32
    %c0_i32_1 = arith.constant 0 : i32
    return %c0_i32, %c0_i32_0 : i32, i32
  }
  func.func @transform_5(%arg0: i32) -> (i32, i32) {
    %c0_i32 = arith.constant 0 : i32
    %c0_i32_0 = arith.constant 0 : i32
    %c0_i32_1 = arith.constant 0 : i32
    return %c0_i32, %c0_i32_0 : i32, i32
  }
  func.func @transform_6(%arg0: i32) -> (i32, i32) {
    %c0_i32 = arith.constant 0 : i32
    %c0_i32_0 = arith.constant 0 : i32
    %c0_i32_1 = arith.constant 0 : i32
    return %c0_i32, %c0_i32_0 : i32, i32
  }
  func.func @transform_7(%arg0: i32) -> (i32, i32) {
    %c0_i32 = arith.constant 0 : i32
    %c0_i32_0 = arith.constant 0 : i32
    %c0_i32_1 = arith.constant 0 : i32
    return %c0_i32, %c0_i32_0 : i32, i32
  }
  func.func @transform_8(%arg0: i32) -> (i32, i32) {
    %c0_i32 = arith.constant 0 : i32
    %c0_i32_0 = arith.constant 0 : i32
    %c0_i32_1 = arith.constant 0 : i32
    return %c0_i32, %c0_i32_0 : i32, i32
  }
  func.func @transform_9(%arg0: i32) -> (i32, i32) {
    %c0_i32 = arith.constant 0 : i32
    %c0_i32_0 = arith.constant 0 : i32
    return %arg0, %c0_i32 : i32, i32
  }
}

</mosaic_0001>

<llo_original>
// kernel: tpu_custom_call.1
$region0: #{tpu_custom_call.1}
  #allocation0 [shape = 'u32[]', space=smem, size = 0x4, offset = 0x4, fixed_abs, tag = 'smem constant byte address 0x4 - core index']
  #allocation1 [shape = 'u32[144,128]{1,0:T(1,128)}', space=vmem, size = 0x12000, scoped, tag = 'internal scratch']
  %s0 = inlined_call_operand.vmem [shape: f32[8,144], index: 0, kind: input, shape index: {}]
  %s1 = inlined_call_operand.hbm [shape: f32[144,384], index: 1, kind: input, shape index: {}]
  %s2 = inlined_call_operand.vmem [shape: f32[1,384], index: 2, kind: input, shape index: {}]
  %s3 = inlined_call_operand.hbm [shape: f32[384,128], index: 3, kind: input, shape index: {}]
  %s4 = inlined_call_operand.vmem [shape: f32[1,128], index: 4, kind: input, shape index: {}]
  %s5 = inlined_call_operand.vmem [shape: f32[128,64], index: 5, kind: input, shape index: {}]
  %s6 = inlined_call_operand.vmem [shape: f32[1,64], index: 6, kind: input, shape index: {}]
  %s7 = inlined_call_operand.vmem [shape: f32[64,128], index: 7, kind: input, shape index: {}]
  %s8 = inlined_call_operand.vmem [shape: f32[1,128], index: 8, kind: input, shape index: {}]
  %s9 = inlined_call_operand.hbm [shape: f32[8,128], index: 9, kind: output, shape index: {}]
  %s10 = sld [smem:[#allocation0]]
  $region54: #{tpu_custom_call.1} parent=0
    _
  %s12 = ssub.s32 1, %s10
  %s13 = scalar_select 0, %s12, %s10
  $region1: #{tpu_custom_call.1} parent=0
    #allocation2 [shape = 'u8[221184]{0}', space=vmem, size = 0x36000, scoped, tag = 'input window, operand 1, single buffered']
    #allocation3 [shape = 's32[1]{0}', space=sflag, size = 0x4, scoped, tag = 'scoped memory for tpu_custom_call.1']
    #allocation4 [shape = 's32[1]{0}', space=sflag, size = 0x4, scoped, tag = 'scoped memory for tpu_custom_call.1']
    #allocation5 [shape = 'u8[196608]{0}', space=vmem, size = 0x30000, scoped, tag = 'input window, operand 3, single buffered']
    #allocation6 [shape = 's32[1]{0}', space=sflag, size = 0x4, scoped, tag = 'scoped memory for tpu_custom_call.1']
    #allocation7 [shape = 'u8[4096]{0}', space=vmem, size = 0x1000, scoped, tag = 'output window, operand 0, single buffered']
    %14 = vsyncpa [#allocation3], 0
    %15 = vsyncpa [#allocation6], 0
    %16 = vsyncpa [#allocation4], 0
    // Predicated region
    $region2: #{tpu_custom_call.1} parent=1 // pred_check
      _
    $region3: #{tpu_custom_call.1} parent=1 // pred_check_branch
      %18 = sbr.rel (0) target = $region5
    $region4: #{tpu_custom_call.1} parent=1 // pred_region
      _
    $region5: #{tpu_custom_call.1} parent=1 // pred_fallthru
      _
    // Predicated region
    $region6: #{tpu_custom_call.1} parent=1 // pred_check
      _
    $region7: #{tpu_custom_call.1} parent=1 // pred_check_branch
      %20 = sbr.rel (0) target = $region9
    $region8: #{tpu_custom_call.1} parent=1 // pred_region
      %s22 = ssub.s32 6912, 6912
      %23 = vsyncadd [#allocation3], %s22
      %s24 = sshll.u32 [#allocation2], 4
      %s25 = int_to_ptr.vmem [resolvable:$true] %s24
      %30 = dma.hbm_to_vmem [thread:$0]  %s1, 6912, %s25, [#allocation3], 384, 384, 24
    $region9: #{tpu_custom_call.1} parent=1 // pred_fallthru
      _
    // Predicated region
    $region10: #{tpu_custom_call.1} parent=1 // pred_check
      _
    $region11: #{tpu_custom_call.1} parent=1 // pred_check_branch
      %32 = sbr.rel (0) target = $region13
    $region12: #{tpu_custom_call.1} parent=1 // pred_region
      _
    $region13: #{tpu_custom_call.1} parent=1 // pred_fallthru
      _
    // Predicated region
    $region14: #{tpu_custom_call.1} parent=1 // pred_check
      _
    $region15: #{tpu_custom_call.1} parent=1 // pred_check_branch
      %34 = sbr.rel (0) target = $region17
    $region16: #{tpu_custom_call.1} parent=1 // pred_region
      %s36 = ssub.s32 6144, 6144
      %37 = vsyncadd [#allocation6], %s36
      %s38 = sshll.u32 [#allocation5], 4
      %s39 = int_to_ptr.vmem [resolvable:$true] %s38
      %44 = dma.hbm_to_vmem [thread:$0]  %s3, 6144, %s39, [#allocation6], 128, 128, 8
    $region17: #{tpu_custom_call.1} parent=1 // pred_fallthru
      _
    // Predicated region
    $region18: #{tpu_custom_call.1} parent=1 // pred_check
      _
    $region19: #{tpu_custom_call.1} parent=1 // pred_check_branch
      %46 = sbr.rel (0) target = $region21
    $region20: #{tpu_custom_call.1} parent=1 // pred_region
      _
    $region21: #{tpu_custom_call.1} parent=1 // pred_fallthru
      _
    // Predicated region
    $region22: #{tpu_custom_call.1} parent=1 // pred_check
      _
    $region23: #{tpu_custom_call.1} parent=1 // pred_check_branch
      %48 = sbr.rel (0) target = $region25
    $region24: #{tpu_custom_call.1} parent=1 // pred_region
      _
    $region25: #{tpu_custom_call.1} parent=1 // pred_fallthru
      _
    // Predicated region
    $region26: #{tpu_custom_call.1} parent=1 // pred_check
      _
    $region27: #{tpu_custom_call.1} parent=1 // pred_check_branch
      %50 = sbr.rel (0) target = $region29
    $region28: #{tpu_custom_call.1} parent=1 // pred_region
      _
    $region29: #{tpu_custom_call.1} parent=1 // pred_fallthru
      _
    // Predicated region
    $region30: #{tpu_custom_call.1} parent=1 // pred_check
      _
    $region31: #{tpu_custom_call.1} parent=1 // pred_check_branch
      %52 = sbr.rel (0) target = $region33
    $region32: #{tpu_custom_call.1} parent=1 // pred_region
      _
    $region33: #{tpu_custom_call.1} parent=1 // pred_fallthru
      _
    // Predicated region
    $region34: #{tpu_custom_call.1} parent=1 // pred_check
      _
    $region35: #{tpu_custom_call.1} parent=1 // pred_check_branch
      %54 = sbr.rel (0) target = $region37
    $region36: #{tpu_custom_call.1} parent=1 // pred_region
      _
    $region37: #{tpu_custom_call.1} parent=1 // pred_fallthru
      _
    // Predicated region
    $region38: #{tpu_custom_call.1} parent=1 // pred_check
      _
    $region39: #{tpu_custom_call.1} parent=1 // pred_check_branch
      %56 = sbr.rel (0) target = $region41
    $region40: #{tpu_custom_call.1} parent=1 // pred_region
      %57 = dma.done [#allocation3], 6912
    $region41: #{tpu_custom_call.1} parent=1 // pred_fallthru
      _
    // Predicated region
    $region42: #{tpu_custom_call.1} parent=1 // pred_check
      _
    $region43: #{tpu_custom_call.1} parent=1 // pred_check_branch
      %59 = sbr.rel (0) target = $region45
    $region44: #{tpu_custom_call.1} parent=1 // pred_region
      %60 = dma.done [#allocation6], 6144
    $region45: #{tpu_custom_call.1} parent=1 // pred_fallthru
      _
    %v61 = vld [vmem:[%s0] sm:$0xff]
    %v62 = vld [vmem:[%s0 + $0x8] sm:$0xff]
    %v63 = vld [vmem:[#allocation2] sm:$0xff]
    %v64 = vld [vmem:[#allocation2 + $0x8] sm:$0xff]
    %v65 = vld [vmem:[#allocation2 + $0x10] sm:$0xff]
    %v66 = vld [vmem:[#allocation2 + $0x18] sm:$0xff]
    %v67 = vld [vmem:[#allocation2 + $0x20] sm:$0xff]
    %v68 = vld [vmem:[#allocation2 + $0x28] sm:$0xff]
    %v69 = vld [vmem:[#allocation2 + $0x30] sm:$0xff]
    %v70 = vld [vmem:[#allocation2 + $0x38] sm:$0xff]
    %v71 = vld [vmem:[#allocation2 + $0x40] sm:$0xff]
    %v72 = vld [vmem:[#allocation2 + $0x48] sm:$0xff]
    %v73 = vld [vmem:[#allocation2 + $0x50] sm:$0xff]
    %v74 = vld [vmem:[#allocation2 + $0x58] sm:$0xff]
    %v75 = vld [vmem:[#allocation2 + $0x60] sm:$0xff]
    %v76 = vld [vmem:[#allocation2 + $0x68] sm:$0xff]
    %v77 = vld [vmem:[#allocation2 + $0x70] sm:$0xff]
    %v78 = vld [vmem:[#allocation2 + $0x78] sm:$0xff]
    %v79 = vld [vmem:[#allocation2 + $0x80] sm:$0xff]
    %v80 = vld [vmem:[#allocation2 + $0x88] sm:$0xff]
    %v81 = vld [vmem:[#allocation2 + $0x90] sm:$0xff]
    %v82 = vld [vmem:[#allocation2 + $0x98] sm:$0xff]
    %v83 = vld [vmem:[#allocation2 + $0xa0] sm:$0xff]
    %v84 = vld [vmem:[#allocation2 + $0xa8] sm:$0xff]
    %v85 = vld [vmem:[#allocation2 + $0xb0] sm:$0xff]
    %v86 = vld [vmem:[#allocation2 + $0xb8] sm:$0xff]
    %v87 = vld [vmem:[#allocation2 + $0xc0] sm:$0xff]
    %v88 = vld [vmem:[#allocation2 + $0xc8] sm:$0xff]
    %v89 = vld [vmem:[#allocation2 + $0xd0] sm:$0xff]
    %v90 = vld [vmem:[#allocation2 + $0xd8] sm:$0xff]
    %v91 = vld [vmem:[#allocation2 + $0xe0] sm:$0xff]
    %v92 = vld [vmem:[#allocation2 + $0xe8] sm:$0xff]
    %v93 = vld [vmem:[#allocation2 + $0xf0] sm:$0xff]
    %v94 = vld [vmem:[#allocation2 + $0xf8] sm:$0xff]
    %v95 = vld [vmem:[#allocation2 + $0x100] sm:$0xff]
    %v96 = vld [vmem:[#allocation2 + $0x108] sm:$0xff]
    %v97 = vld [vmem:[#allocation2 + $0x110] sm:$0xff]
    %v98 = vld [vmem:[#allocation2 + $0x118] sm:$0xff]
    %v99 = vld [vmem:[#allocation2 + $0x120] sm:$0xff]
    %v100 = vld [vmem:[#allocation2 + $0x128] sm:$0xff]
    %v101 = vld [vmem:[#allocation2 + $0x130] sm:$0xff]
    %v102 = vld [vmem:[#allocation2 + $0x138] sm:$0xff]
    %v103 = vld [vmem:[#allocation2 + $0x140] sm:$0xff]
    %v104 = vld [vmem:[#allocation2 + $0x148] sm:$0xff]
    %v105 = vld [vmem:[#allocation2 + $0x150] sm:$0xff]
    %v106 = vld [vmem:[#allocation2 + $0x158] sm:$0xff]
    %v107 = vld [vmem:[#allocation2 + $0x160] sm:$0xff]
    %v108 = vld [vmem:[#allocation2 + $0x168] sm:$0xff]
    %v109 = vld [vmem:[#allocation2 + $0x170] sm:$0xff]
    %v110 = vld [vmem:[#allocation2 + $0x178] sm:$0xff]
    %v111 = vld [vmem:[#allocation2 + $0x180] sm:$0xff]
    %v112 = vld [vmem:[#allocation2 + $0x188] sm:$0xff]
    %v113 = vld [vmem:[#allocation2 + $0x190] sm:$0xff]
    %v114 = vld [vmem:[#allocation2 + $0x198] sm:$0xff]
    %v115 = vld [vmem:[#allocation2 + $0x1a0] sm:$0xff]
    %v116 = vld [vmem:[#allocation2 + $0x1a8] sm:$0xff]
    %v117 = vld [vmem:[%s2] sm:$0x7]
    %v119 = vlaneseq
    %v120 = vshrl.u32 %v119, 7
    %v121 = vsub.s32 0, %v120
    %v122 = vrot.slane %v117, %v121
    %v123 = vlaneseq
    %v124 = vshrl.u32 %v123, 7
    %v125 = vsub.s32 1, %v124
    %v126 = vrot.slane %v117, %v125
    %v127 = vlaneseq
    %v128 = vshrl.u32 %v127, 7
    %v129 = vsub.s32 2, %v128
    %v130 = vrot.slane %v117, %v129
    %vm134 = vcmask 130048
    %v136 = vsel %vm134, %v62, 0
    %138 = vmatprep.subr.mxu0 %v64
    %139 = vmatpush1.msra.mxu0 %v63
    %140 = vmatprep.subr.mxu0 %v67
    %141 = vmatpush1.msra.mxu0 %v66
    %142 = vmatprep.subr.mxu0 %v70
    %143 = vmatpush1.msra.mxu0 %v69
    %144 = vmatprep.subr.mxu0 %v73
    %145 = vmatpush1.msra.mxu0 %v72
    %146 = vmatprep.subr.mxu0 %v76
    %147 = vmatpush1.msra.mxu0 %v75
    %148 = vmatprep.subr.mxu0 %v79
    %149 = vmatpush1.msra.mxu0 %v78
    %150 = vmatprep.subr.mxu0 %v82
    %151 = vmatpush1.msra.mxu0 %v81
    %152 = vmatprep.subr.mxu0 %v85
    %153 = vmatpush1.msra.mxu0 %v84
    %154 = vmatprep.subr.mxu0 %v88
    %155 = vmatpush1.msra.mxu0 %v87
    %156 = vmatprep.subr.mxu0 %v91
    %157 = vmatpush1.msra.mxu0 %v90
    %158 = vmatprep.subr.mxu0 %v94
    %159 = vmatpush1.msra.mxu0 %v93
    %160 = vmatprep.subr.mxu0 %v97
    %161 = vmatpush1.msra.mxu0 %v96
    %162 = vmatprep.subr.mxu0 %v100
    %163 = vmatpush1.msra.mxu0 %v99
    %164 = vmatprep.subr.mxu0 %v103
    %165 = vmatpush1.msra.mxu0 %v102
    %166 = vmatprep.subr.mxu0 %v106
    %167 = vmatpush1.msra.mxu0 %v105
    %168 = vmatprep.subr.mxu0 %v109
    %169 = vmatpush1.msra.mxu0 %v108
    %170 = vmatprep.subr.mxu0 %v112
    %171 = vmatpush1.msra.mxu0 %v111
    %172 = vmatprep.subr.mxu0 %v115
    %173 = vmatpush1.msra.mxu0 %v114
    %174 = vmatprep.subr.mxu0 0.0
    %175 = vmatpush1.msra.mxu0 0.0
    %176 = vmatprep.subr.mxu0 0.0
    %177 = vmatpush1.msra.mxu0 0.0
    %178 = vmatprep.subr.mxu0 0.0
    %179 = vmatpush1.msra.mxu0 0.0
    %180 = vmatprep.subr.mxu0 0.0
    %181 = vmatpush1.msra.mxu0 0.0
    %182 = vmatprep.subr.mxu0 0.0
    %183 = vmatpush1.msra.mxu0 0.0
    %184 = vmatprep.subr.mxu0 0.0
    %185 = vmatpush1.msra.mxu0 0.0
    %186 = vmatprep.subr.mxu0 0.0
    %187 = vmatpush1.msra.mxu0 0.0
    %188 = vmatprep.subr.mxu0 0.0
    %189 = vmatpush1.msra.mxu0 0.0
    %190 = vmatprep.subr.mxu0 0.0
    %191 = vmatpush1.msra.mxu0 0.0
    %192 = vmatprep.subr.mxu0 0.0
    %193 = vmatpush1.msra.mxu0 0.0
    %194 = vmatprep.subr.mxu0 0.0
    %195 = vmatpush1.msra.mxu0 0.0
    %196 = vmatprep.subr.mxu0 0.0
    %197 = vmatpush1.msra.mxu0 0.0
    %198 = vmatprep.subr.mxu0 0.0
    %199 = vmatpush1.msra.mxu0 0.0
    %200 = vmatprep.subr.mxu0 0.0
    %201 = vmatpush1.msra.mxu0 0.0
    %202 = vmatprep.mubr.f32.mxu0 %v136
    %203 = vmatmul.mubr.f32.gmra.mrb[0].mxu0 %v61
    %v204 = vpop.f32.mrb[0].mxu0
    %v205 = vadd.f32 %v122, %v204
    %v206 = vpop.f32.mrb[0].mxu0
    %v207 = vadd.f32 %v126, %v206
    %208 = vdwg.mxu0
    %209 = vmatprep.subr.mxu0 0.0
    %210 = vmatpush1.msra.mxu0 %v65
    %211 = vmatprep.subr.mxu0 0.0
    %212 = vmatpush1.msra.mxu0 %v68
    %213 = vmatprep.subr.mxu0 0.0
    %214 = vmatpush1.msra.mxu0 %v71
    %215 = vmatprep.subr.mxu0 0.0
    %216 = vmatpush1.msra.mxu0 %v74
    %217 = vmatprep.subr.mxu0 0.0
    %218 = vmatpush1.msra.mxu0 %v77
    %219 = vmatprep.subr.mxu0 0.0
    %220 = vmatpush1.msra.mxu0 %v80
    %221 = vmatprep.subr.mxu0 0.0
    %222 = vmatpush1.msra.mxu0 %v83
    %223 = vmatprep.subr.mxu0 0.0
    %224 = vmatpush1.msra.mxu0 %v86
    %225 = vmatprep.subr.mxu0 0.0
    %226 = vmatpush1.msra.mxu0 %v89
    %227 = vmatprep.subr.mxu0 0.0
    %228 = vmatpush1.msra.mxu0 %v92
    %229 = vmatprep.subr.mxu0 0.0
    %230 = vmatpush1.msra.mxu0 %v95
    %231 = vmatprep.subr.mxu0 0.0
    %232 = vmatpush1.msra.mxu0 %v98
    %233 = vmatprep.subr.mxu0 0.0
    %234 = vmatpush1.msra.mxu0 %v101
    %235 = vmatprep.subr.mxu0 0.0
    %236 = vmatpush1.msra.mxu0 %v104
    %237 = vmatprep.subr.mxu0 0.0
    %238 = vmatpush1.msra.mxu0 %v107
    %239 = vmatprep.subr.mxu0 0.0
    %240 = vmatpush1.msra.mxu0 %v110
    %241 = vmatprep.subr.mxu0 0.0
    %242 = vmatpush1.msra.mxu0 %v113
    %243 = vmatprep.subr.mxu0 0.0
    %244 = vmatpush1.msra.mxu0 %v116
    %245 = vmatprep.subr.mxu0 0.0
    %246 = vmatpush1.msra.mxu0 0.0
    %247 = vmatprep.subr.mxu0 0.0
    %248 = vmatpush1.msra.mxu0 0.0
    %249 = vmatprep.subr.mxu0 0.0
    %250 = vmatpush1.msra.mxu0 0.0
    %251 = vmatprep.subr.mxu0 0.0
    %252 = vmatpush1.msra.mxu0 0.0
    %253 = vmatprep.subr.mxu0 0.0
    %254 = vmatpush1.msra.mxu0 0.0
    %255 = vmatprep.subr.mxu0 0.0
    %256 = vmatpush1.msra.mxu0 0.0
    %257 = vmatprep.subr.mxu0 0.0
    %258 = vmatpush1.msra.mxu0 0.0
    %259 = vmatprep.subr.mxu0 0.0
    %260 = vmatpush1.msra.mxu0 0.0
    %261 = vmatprep.subr.mxu0 0.0
    %262 = vmatpush1.msra.mxu0 0.0
    %263 = vmatprep.subr.mxu0 0.0
    %264 = vmatpush1.msra.mxu0 0.0
    %265 = vmatprep.subr.mxu0 0.0
    %266 = vmatpush1.msra.mxu0 0.0
    %267 = vmatprep.subr.mxu0 0.0
    %268 = vmatpush1.msra.mxu0 0.0
    %269 = vmatprep.subr.mxu0 0.0
    %270 = vmatpush1.msra.mxu0 0.0
    %271 = vmatprep.subr.mxu0 0.0
    %272 = vmatpush1.msra.mxu0 0.0
    %273 = vmatprep.mubr.f32.mxu0 %v136
    %274 = vmatmul.mubr.f32.gmra.mrb[0].mxu0 %v61
    %v275 = vpop.f32.mrb[0].mxu0
    %v276 = vadd.f32 %v130, %v275
    %v277 = vpop.f32.mrb[0].mxu0
    %278 = vdwg.mxu0
    %v279 = vmax.f32 %v205, 0.0
    %v280 = vmax.f32 %v207, 0.0
    %v281 = vmax.f32 %v276, 0.0
    %v282 = vld [vmem:[#allocation5] sm:$0xff]
    %v283 = vld [vmem:[#allocation5 + $0x8] sm:$0xff]
    %v284 = vld [vmem:[#allocation5 + $0x10] sm:$0xff]
    %v285 = vld [vmem:[#allocation5 + $0x18] sm:$0xff]
    %v286 = vld [vmem:[#allocation5 + $0x20] sm:$0xff]
    %v287 = vld [vmem:[#allocation5 + $0x28] sm:$0xff]
    %v288 = vld [vmem:[#allocation5 + $0x30] sm:$0xff]
    %v289 = vld [vmem:[#allocation5 + $0x38] sm:$0xff]
    %v290 = vld [vmem:[#allocation5 + $0x40] sm:$0xff]
    %v291 = vld [vmem:[#allocation5 + $0x48] sm:$0xff]
    %v292 = vld [vmem:[#allocation5 + $0x50] sm:$0xff]
    %v293 = vld [vmem:[#allocation5 + $0x58] sm:$0xff]
    %v294 = vld [vmem:[#allocation5 + $0x60] sm:$0xff]
    %v295 = vld [vmem:[#allocation5 + $0x68] sm:$0xff]
    %v296 = vld [vmem:[#allocation5 + $0x70] sm:$0xff]
    %v297 = vld [vmem:[#allocation5 + $0x78] sm:$0xff]
    %v298 = vld [vmem:[#allocation5 + $0x80] sm:$0xff]
    %v299 = vld [vmem:[#allocation5 + $0x88] sm:$0xff]
    %v300 = vld [vmem:[#allocation5 + $0x90] sm:$0xff]
    %v301 = vld [vmem:[#allocation5 + $0x98] sm:$0xff]
    %v302 = vld [vmem:[#allocation5 + $0xa0] sm:$0xff]
    %v303 = vld [vmem:[#allocation5 + $0xa8] sm:$0xff]
    %v304 = vld [vmem:[#allocation5 + $0xb0] sm:$0xff]
    %v305 = vld [vmem:[#allocation5 + $0xb8] sm:$0xff]
    %v306 = vld [vmem:[#allocation5 + $0xc0] sm:$0xff]
    %v307 = vld [vmem:[#allocation5 + $0xc8] sm:$0xff]
    %v308 = vld [vmem:[#allocation5 + $0xd0] sm:$0xff]
    %v309 = vld [vmem:[#allocation5 + $0xd8] sm:$0xff]
    %v310 = vld [vmem:[#allocation5 + $0xe0] sm:$0xff]
    %v311 = vld [vmem:[#allocation5 + $0xe8] sm:$0xff]
    %v312 = vld [vmem:[#allocation5 + $0xf0] sm:$0xff]
    %v313 = vld [vmem:[#allocation5 + $0xf8] sm:$0xff]
    %v314 = vld [vmem:[#allocation5 + $0x100] sm:$0xff]
    %v315 = vld [vmem:[#allocation5 + $0x108] sm:$0xff]
    %v316 = vld [vmem:[#allocation5 + $0x110] sm:$0xff]
    %v317 = vld [vmem:[#allocation5 + $0x118] sm:$0xff]
    %v318 = vld [vmem:[#allocation5 + $0x120] sm:$0xff]
    %v319 = vld [vmem:[#allocation5 + $0x128] sm:$0xff]
    %v320 = vld [vmem:[#allocation5 + $0x130] sm:$0xff]
    %v321 = vld [vmem:[#allocation5 + $0x138] sm:$0xff]
    %v322 = vld [vmem:[#allocation5 + $0x140] sm:$0xff]
    %v323 = vld [vmem:[#allocation5 + $0x148] sm:$0xff]
    %v324 = vld [vmem:[#allocation5 + $0x150] sm:$0xff]
    %v325 = vld [vmem:[#allocation5 + $0x158] sm:$0xff]
    %v326 = vld [vmem:[#allocation5 + $0x160] sm:$0xff]
    %v327 = vld [vmem:[#allocation5 + $0x168] sm:$0xff]
    %v328 = vld [vmem:[#allocation5 + $0x170] sm:$0xff]
    %v329 = vld [vmem:[#allocation5 + $0x178] sm:$0xff]
    %v330 = vld [vmem:[%s4] sm:$0x1]
    %v332 = vlaneseq
    %v333 = vshrl.u32 %v332, 7
    %v334 = vsub.s32 0, %v333
    %v335 = vrot.slane %v330, %v334
    %337 = vmatprep.subr.mxu0 0.0
    %338 = vmatpush1.msra.mxu0 %v282
    %339 = vmatprep.subr.mxu0 0.0
    %340 = vmatpush1.msra.mxu0 %v283
    %341 = vmatprep.subr.mxu0 0.0
    %342 = vmatpush1.msra.mxu0 %v284
    %343 = vmatprep.subr.mxu0 0.0
    %344 = vmatpush1.msra.mxu0 %v285
    %345 = vmatprep.subr.mxu0 0.0
    %346 = vmatpush1.msra.mxu0 %v286
    %347 = vmatprep.subr.mxu0 0.0
    %348 = vmatpush1.msra.mxu0 %v287
    %349 = vmatprep.subr.mxu0 0.0
    %350 = vmatpush1.msra.mxu0 %v288
    %351 = vmatprep.subr.mxu0 0.0
    %352 = vmatpush1.msra.mxu0 %v289
    %353 = vmatprep.subr.mxu0 0.0
    %354 = vmatpush1.msra.mxu0 %v290
    %355 = vmatprep.subr.mxu0 0.0
    %356 = vmatpush1.msra.mxu0 %v291
    %357 = vmatprep.subr.mxu0 0.0
    %358 = vmatpush1.msra.mxu0 %v292
    %359 = vmatprep.subr.mxu0 0.0
    %360 = vmatpush1.msra.mxu0 %v293
    %361 = vmatprep.subr.mxu0 0.0
    %362 = vmatpush1.msra.mxu0 %v294
    %363 = vmatprep.subr.mxu0 0.0
    %364 = vmatpush1.msra.mxu0 %v295
    %365 = vmatprep.subr.mxu0 0.0
    %366 = vmatpush1.msra.mxu0 %v296
    %367 = vmatprep.subr.mxu0 0.0
    %368 = vmatpush1.msra.mxu0 %v297
    %369 = vmatprep.subr.mxu0 0.0
    %370 = vmatpush1.msra.mxu0 %v298
    %371 = vmatprep.subr.mxu0 0.0
    %372 = vmatpush1.msra.mxu0 %v299
    %373 = vmatprep.subr.mxu0 0.0
    %374 = vmatpush1.msra.mxu0 %v300
    %375 = vmatprep.subr.mxu0 0.0
    %376 = vmatpush1.msra.mxu0 %v301
    %377 = vmatprep.subr.mxu0 0.0
    %378 = vmatpush1.msra.mxu0 %v302
    %379 = vmatprep.subr.mxu0 0.0
    %380 = vmatpush1.msra.mxu0 %v303
    %381 = vmatprep.subr.mxu0 0.0
    %382 = vmatpush1.msra.mxu0 %v304
    %383 = vmatprep.subr.mxu0 0.0
    %384 = vmatpush1.msra.mxu0 %v305
    %385 = vmatprep.subr.mxu0 0.0
    %386 = vmatpush1.msra.mxu0 %v306
    %387 = vmatprep.subr.mxu0 0.0
    %388 = vmatpush1.msra.mxu0 %v307
    %389 = vmatprep.subr.mxu0 0.0
    %390 = vmatpush1.msra.mxu0 %v308
    %391 = vmatprep.subr.mxu0 0.0
    %392 = vmatpush1.msra.mxu0 %v309
    %393 = vmatprep.subr.mxu0 0.0
    %394 = vmatpush1.msra.mxu0 %v310
    %395 = vmatprep.subr.mxu0 0.0
    %396 = vmatpush1.msra.mxu0 %v311
    %397 = vmatprep.subr.mxu0 0.0
    %398 = vmatpush1.msra.mxu0 %v312
    %399 = vmatprep.subr.mxu0 0.0
    %400 = vmatpush1.msra.mxu0 %v313
    %401 = vmatprep.mubr.f32.mxu0 %v280
    %402 = vmatmul.mubr.f32.gmra.mrb[0].mxu0 %v279
    %v403 = vpop.f32.mrb[0].mxu0
    %v404 = vadd.f32 %v335, %v403
    %v405 = vpop.f32.mrb[0].mxu0
    %406 = vdwg.mxu0
    %407 = vmatprep.subr.mxu0 0.0
    %408 = vmatpush1.msra.mxu0 %v314
    %409 = vmatprep.subr.mxu0 0.0
    %410 = vmatpush1.msra.mxu0 %v315
    %411 = vmatprep.subr.mxu0 0.0
    %412 = vmatpush1.msra.mxu0 %v316
    %413 = vmatprep.subr.mxu0 0.0
    %414 = vmatpush1.msra.mxu0 %v317
    %415 = vmatprep.subr.mxu0 0.0
    %416 = vmatpush1.msra.mxu0 %v318
    %417 = vmatprep.subr.mxu0 0.0
    %418 = vmatpush1.msra.mxu0 %v319
    %419 = vmatprep.subr.mxu0 0.0
    %420 = vmatpush1.msra.mxu0 %v320
    %421 = vmatprep.subr.mxu0 0.0
    %422 = vmatpush1.msra.mxu0 %v321
    %423 = vmatprep.subr.mxu0 0.0
    %424 = vmatpush1.msra.mxu0 %v322
    %425 = vmatprep.subr.mxu0 0.0
    %426 = vmatpush1.msra.mxu0 %v323
    %427 = vmatprep.subr.mxu0 0.0
    %428 = vmatpush1.msra.mxu0 %v324
    %429 = vmatprep.subr.mxu0 0.0
    %430 = vmatpush1.msra.mxu0 %v325
    %431 = vmatprep.subr.mxu0 0.0
    %432 = vmatpush1.msra.mxu0 %v326
    %433 = vmatprep.subr.mxu0 0.0
    %434 = vmatpush1.msra.mxu0 %v327
    %435 = vmatprep.subr.mxu0 0.0
    %436 = vmatpush1.msra.mxu0 %v328
    %437 = vmatprep.subr.mxu0 0.0
    %438 = vmatpush1.msra.mxu0 %v329
    %439 = vmatprep.subr.mxu0 0.0
    %440 = vmatpush1.msra.mxu0 0.0
    %441 = vmatprep.subr.mxu0 0.0
    %442 = vmatpush1.msra.mxu0 0.0
    %443 = vmatprep.subr.mxu0 0.0
    %444 = vmatpush1.msra.mxu0 0.0
    %445 = vmatprep.subr.mxu0 0.0
    %446 = vmatpush1.msra.mxu0 0.0
    %447 = vmatprep.subr.mxu0 0.0
    %448 = vmatpush1.msra.mxu0 0.0
    %449 = vmatprep.subr.mxu0 0.0
    %450 = vmatpush1.msra.mxu0 0.0
    %451 = vmatprep.subr.mxu0 0.0
    %452 = vmatpush1.msra.mxu0 0.0
    %453 = vmatprep.subr.mxu0 0.0
    %454 = vmatpush1.msra.mxu0 0.0
    %455 = vmatprep.subr.mxu0 0.0
    %456 = vmatpush1.msra.mxu0 0.0
    %457 = vmatprep.subr.mxu0 0.0
    %458 = vmatpush1.msra.mxu0 0.0
    %459 = vmatprep.subr.mxu0 0.0
    %460 = vmatpush1.msra.mxu0 0.0
    %461 = vmatprep.subr.mxu0 0.0
    %462 = vmatpush1.msra.mxu0 0.0
    %463 = vmatprep.subr.mxu0 0.0
    %464 = vmatpush1.msra.mxu0 0.0
    %465 = vmatprep.subr.mxu0 0.0
    %466 = vmatpush1.msra.mxu0 0.0
    %467 = vmatprep.subr.mxu0 0.0
    %468 = vmatpush1.msra.mxu0 0.0
    %469 = vmatprep.subr.mxu0 0.0
    %470 = vmatpush1.msra.mxu0 0.0
    %471 = vmatprep.mubr.f32.mxu0 0.0
    %472 = vmatmul.mubr.f32.gmra.mrb[0].mxu0 %v281
    %v473 = vpop.f32.mrb[0].mxu0
    %v474 = vadd.f32 %v404, %v473
    %v475 = vpop.f32.mrb[0].mxu0
    %476 = vdwg.mxu0
    %v477 = vmax.f32 %v474, 0.0
    %v478 = vld [vmem:[%s5] sm:$0xff]
    %v479 = vld [vmem:[%s5 + $0x8] sm:$0xff]
    %v480 = vld [vmem:[%s5 + $0x10] sm:$0xff]
    %v481 = vld [vmem:[%s5 + $0x18] sm:$0xff]
    %v482 = vld [vmem:[%s5 + $0x20] sm:$0xff]
    %v483 = vld [vmem:[%s5 + $0x28] sm:$0xff]
    %v484 = vld [vmem:[%s5 + $0x30] sm:$0xff]
    %v485 = vld [vmem:[%s5 + $0x38] sm:$0xff]
    %v486 = vld [vmem:[%s5 + $0x40] sm:$0xff]
    %v487 = vld [vmem:[%s5 + $0x48] sm:$0xff]
    %v488 = vld [vmem:[%s5 + $0x50] sm:$0xff]
    %v489 = vld [vmem:[%s5 + $0x58] sm:$0xff]
    %v490 = vld [vmem:[%s5 + $0x60] sm:$0xff]
    %v491 = vld [vmem:[%s5 + $0x68] sm:$0xff]
    %v492 = vld [vmem:[%s5 + $0x70] sm:$0xff]
    %v493 = vld [vmem:[%s5 + $0x78] sm:$0xff]
    %v494 = vld [vmem:[%s6] sm:$0x1]
    %v496 = vlaneseq
    %v497 = vshrl.u32 %v496, 7
    %v498 = vsub.s32 0, %v497
    %v499 = vrot.slane %v494, %v498
    %501 = vmatprep.subr.mxu0 0.0
    %502 = vmatpush1.msra.mxu0 %v478
    %503 = vmatprep.subr.mxu0 0.0
    %504 = vmatpush1.msra.mxu0 %v479
    %505 = vmatprep.subr.mxu0 0.0
    %506 = vmatpush1.msra.mxu0 %v480
    %507 = vmatprep.subr.mxu0 0.0
    %508 = vmatpush1.msra.mxu0 %v481
    %509 = vmatprep.subr.mxu0 0.0
    %510 = vmatpush1.msra.mxu0 %v482
    %511 = vmatprep.subr.mxu0 0.0
    %512 = vmatpush1.msra.mxu0 %v483
    %513 = vmatprep.subr.mxu0 0.0
    %514 = vmatpush1.msra.mxu0 %v484
    %515 = vmatprep.subr.mxu0 0.0
    %516 = vmatpush1.msra.mxu0 %v485
    %517 = vmatprep.subr.mxu0 0.0
    %518 = vmatpush1.msra.mxu0 %v486
    %519 = vmatprep.subr.mxu0 0.0
    %520 = vmatpush1.msra.mxu0 %v487
    %521 = vmatprep.subr.mxu0 0.0
    %522 = vmatpush1.msra.mxu0 %v488
    %523 = vmatprep.subr.mxu0 0.0
    %524 = vmatpush1.msra.mxu0 %v489
    %525 = vmatprep.subr.mxu0 0.0
    %526 = vmatpush1.msra.mxu0 %v490
    %527 = vmatprep.subr.mxu0 0.0
    %528 = vmatpush1.msra.mxu0 %v491
    %529 = vmatprep.subr.mxu0 0.0
    %530 = vmatpush1.msra.mxu0 %v492
    %531 = vmatprep.subr.mxu0 0.0
    %532 = vmatpush1.msra.mxu0 %v493
    %533 = vmatprep.subr.mxu0 0.0
    %534 = vmatpush1.msra.mxu0 0.0
    %535 = vmatprep.subr.mxu0 0.0
    %536 = vmatpush1.msra.mxu0 0.0
    %537 = vmatprep.subr.mxu0 0.0
    %538 = vmatpush1.msra.mxu0 0.0
    %539 = vmatprep.subr.mxu0 0.0
    %540 = vmatpush1.msra.mxu0 0.0
    %541 = vmatprep.subr.mxu0 0.0
    %542 = vmatpush1.msra.mxu0 0.0
    %543 = vmatprep.subr.mxu0 0.0
    %544 = vmatpush1.msra.mxu0 0.0
    %545 = vmatprep.subr.mxu0 0.0
    %546 = vmatpush1.msra.mxu0 0.0
    %547 = vmatprep.subr.mxu0 0.0
    %548 = vmatpush1.msra.mxu0 0.0
    %549 = vmatprep.subr.mxu0 0.0
    %550 = vmatpush1.msra.mxu0 0.0
    %551 = vmatprep.subr.mxu0 0.0
    %552 = vmatpush1.msra.mxu0 0.0
    %553 = vmatprep.subr.mxu0 0.0
    %554 = vmatpush1.msra.mxu0 0.0
    %555 = vmatprep.subr.mxu0 0.0
    %556 = vmatpush1.msra.mxu0 0.0
    %557 = vmatprep.subr.mxu0 0.0
    %558 = vmatpush1.msra.mxu0 0.0
    %559 = vmatprep.subr.mxu0 0.0
    %560 = vmatpush1.msra.mxu0 0.0
    %561 = vmatprep.subr.mxu0 0.0
    %562 = vmatpush1.msra.mxu0 0.0
    %563 = vmatprep.subr.mxu0 0.0
    %564 = vmatpush1.msra.mxu0 0.0
    %565 = vmatprep.mubr.f32.mxu0 0.0
    %566 = vmatmul.mubr.f32.gmra.mrb[0].mxu0 %v477
    %v567 = vpop.f32.mrb[0].mxu0
    %v568 = vadd.f32 %v499, %v567
    %v569 = vpop.f32.mrb[0].mxu0
    %570 = vdwg.mxu0
    %v571 = vmax.f32 %v568, 0.0
    %v572 = vld [vmem:[%s7] sm:$0xff]
    %v573 = vld [vmem:[%s7 + $0x8] sm:$0xff]
    %v574 = vld [vmem:[%s7 + $0x10] sm:$0xff]
    %v575 = vld [vmem:[%s7 + $0x18] sm:$0xff]
    %v576 = vld [vmem:[%s7 + $0x20] sm:$0xff]
    %v577 = vld [vmem:[%s7 + $0x28] sm:$0xff]
    %v578 = vld [vmem:[%s7 + $0x30] sm:$0xff]
    %v579 = vld [vmem:[%s7 + $0x38] sm:$0xff]
    %v580 = vld [vmem:[%s8] sm:$0x1]
    %v582 = vlaneseq
    %v583 = vshrl.u32 %v582, 7
    %v584 = vsub.s32 0, %v583
    %v585 = vrot.slane %v580, %v584
    %vm587 = vcmask 523264
    %v589 = vsel %vm587, %v571, 0
    %591 = vmatprep.subr.mxu0 0.0
    %592 = vmatpush1.msra.mxu0 %v572
    %593 = vmatprep.subr.mxu0 0.0
    %594 = vmatpush1.msra.mxu0 %v573
    %595 = vmatprep.subr.mxu0 0.0
    %596 = vmatpush1.msra.mxu0 %v574
    %597 = vmatprep.subr.mxu0 0.0
    %598 = vmatpush1.msra.mxu0 %v575
    %599 = vmatprep.subr.mxu0 0.0
    %600 = vmatpush1.msra.mxu0 %v576
    %601 = vmatprep.subr.mxu0 0.0
    %602 = vmatpush1.msra.mxu0 %v577
    %603 = vmatprep.subr.mxu0 0.0
    %604 = vmatpush1.msra.mxu0 %v578
    %605 = vmatprep.subr.mxu0 0.0
    %606 = vmatpush1.msra.mxu0 %v579
    %607 = vmatprep.subr.mxu0 0.0
    %608 = vmatpush1.msra.mxu0 0.0
    %609 = vmatprep.subr.mxu0 0.0
    %610 = vmatpush1.msra.mxu0 0.0
    %611 = vmatprep.subr.mxu0 0.0
    %612 = vmatpush1.msra.mxu0 0.0
    %613 = vmatprep.subr.mxu0 0.0
    %614 = vmatpush1.msra.mxu0 0.0
    %615 = vmatprep.subr.mxu0 0.0
    %616 = vmatpush1.msra.mxu0 0.0
    %617 = vmatprep.subr.mxu0 0.0
    %618 = vmatpush1.msra.mxu0 0.0
    %619 = vmatprep.subr.mxu0 0.0
    %620 = vmatpush1.msra.mxu0 0.0
    %621 = vmatprep.subr.mxu0 0.0
    %622 = vmatpush1.msra.mxu0 0.0
    %623 = vmatprep.subr.mxu0 0.0
    %624 = vmatpush1.msra.mxu0 0.0
    %625 = vmatprep.subr.mxu0 0.0
    %626 = vmatpush1.msra.mxu0 0.0
    %627 = vmatprep.subr.mxu0 0.0
    %628 = vmatpush1.msra.mxu0 0.0
    %629 = vmatprep.subr.mxu0 0.0
    %630 = vmatpush1.msra.mxu0 0.0
    %631 = vmatprep.subr.mxu0 0.0
    %632 = vmatpush1.msra.mxu0 0.0
    %633 = vmatprep.subr.mxu0 0.0
    %634 = vmatpush1.msra.mxu0 0.0
    %635 = vmatprep.subr.mxu0 0.0
    %636 = vmatpush1.msra.mxu0 0.0
    %637 = vmatprep.subr.mxu0 0.0
    %638 = vmatpush1.msra.mxu0 0.0
    %639 = vmatprep.subr.mxu0 0.0
    %640 = vmatpush1.msra.mxu0 0.0
    %641 = vmatprep.subr.mxu0 0.0
    %642 = vmatpush1.msra.mxu0 0.0
    %643 = vmatprep.subr.mxu0 0.0
    %644 = vmatpush1.msra.mxu0 0.0
    %645 = vmatprep.subr.mxu0 0.0
    %646 = vmatpush1.msra.mxu0 0.0
    %647 = vmatprep.subr.mxu0 0.0
    %648 = vmatpush1.msra.mxu0 0.0
    %649 = vmatprep.subr.mxu0 0.0
    %650 = vmatpush1.msra.mxu0 0.0
    %651 = vmatprep.subr.mxu0 0.0
    %652 = vmatpush1.msra.mxu0 0.0
    %653 = vmatprep.subr.mxu0 0.0
    %654 = vmatpush1.msra.mxu0 0.0
    %655 = vmatprep.mubr.f32.mxu0 0.0
    %656 = vmatmul.mubr.f32.gmra.mrb[0].mxu0 %v589
    %v657 = vpop.f32.mrb[0].mxu0
    %v658 = vadd.f32 %v585, %v657
    %v659 = vpop.f32.mrb[0].mxu0
    %660 = vdwg.mxu0
    %661 = vst [vmem:[#allocation7] sm:$0xff] %v658
    // Predicated region
    $region46: #{tpu_custom_call.1} parent=1 // pred_check
      _
    $region47: #{tpu_custom_call.1} parent=1 // pred_check_branch
      %663 = sbr.rel (0) target = $region49
    $region48: #{tpu_custom_call.1} parent=1 // pred_region
      %s665 = ssub.s32 128, 128
      %666 = vsyncadd [#allocation4], %s665
      %s668 = sshll.u32 [#allocation7], 4
      %s669 = int_to_ptr.vmem [resolvable:$true] %s668
      %671 = dma.vmem_to_hbm [thread:$0]  %s669, 128, %s9, [#allocation4]
    $region49: #{tpu_custom_call.1} parent=1 // pred_fallthru
      _
    // Predicated region
    $region50: #{tpu_custom_call.1} parent=1 // pred_check
      _
    $region51: #{tpu_custom_call.1} parent=1 // pred_check_branch
      %673 = sbr.rel (0) target = $region53
    $region52: #{tpu_custom_call.1} parent=1 // pred_region
      %674 = dma.done [#allocation4], 128
    $region53: #{tpu_custom_call.1} parent=1 // pred_fallthru
      _
    %675 = vsyncpa [#allocation3], 1
    %676 = vsyncpa [#allocation6], 1
    %677 = vsyncpa [#allocation4], 1

</llo_original>
